<compile_context>
chip_gen: v6e
topology: v6e:2x2x1
jax: 0.10.0
libtpu: 0.0.40
codegen_flags: <defaults>
</compile_context>

<pallas_src>
import jax
import jax.numpy as jnp
from jax.experimental import pallas as pl
from jax.experimental.pallas import tpu as pltpu

SQRT_HALF = 0.7071067811865476  # matches nn.init.constant(..., 0.7071067811865476)


def _split3_bf16(x):
    """3-way bf16 decomposition of an f32 array (x ~= h0 + h1 + h2, ~f32-exact)."""
    h0 = x.astype(jnp.bfloat16)
    r0 = x - h0.astype(jnp.float32)
    h1 = r0.astype(jnp.bfloat16)
    r1 = r0 - h1.astype(jnp.float32)
    h2 = r1.astype(jnp.bfloat16)
    return (h0, h1, h2)


def _dot3(parts, w):
    """sum_i parts[i] @ w, bf16 MXU passes accumulated in f32."""
    acc = jnp.dot(parts[0], w, preferred_element_type=jnp.float32)
    for p in parts[1:]:
        acc = acc + jnp.dot(p, w, preferred_element_type=jnp.float32)
    return acc


def _recon_kernel(x_ref, u_ref, v_ref, o_ref):
    # x_ref: (1, 4, TH, W) f32
    # u_ref, v_ref: (KC, 2*KC) bf16 constant spread/interleave matrices
    # o_ref: (1, TH, 4*W) f32; lanes [0, 2W) = even output row, [2W, 4W) = odd row
    kc = u_ref.shape[0]
    w = x_ref.shape[-1]
    u = u_ref[...]
    v = v_ref[...]
    for ci in range(w // kc):
        sl = slice(ci * kc, (ci + 1) * kc)
        x0 = x_ref[0, 0, :, sl]
        x1 = x_ref[0, 1, :, sl]
        x2 = x_ref[0, 2, :, sl]
        x3 = x_ref[0, 3, :, sl]
        a = x0 + x1   # feeds even output rows
        b = x0 - x1   # feeds odd output rows
        c = x2 + x3
        d = x2 - x3
        # MXU spread matrices (entries 0, +-0.5) produce lane-interleaved columns.
        r_even = _dot3(_split3_bf16(a), u) + _dot3(_split3_bf16(c), v)
        r_odd = _dot3(_split3_bf16(b), u) + _dot3(_split3_bf16(d), v)
        lo = 2 * kc * ci
        hi = 2 * kc * (ci + 1)
        o_ref[0, :, lo:hi] = r_even
        o_ref[0, :, 2 * w + lo:2 * w + hi] = r_odd


def _interleave_weights(kc):
    """U, V (kc, 2kc): (x @ U)[:, 2j+c] = 0.5*x[:, j]; (x @ V)[:, 2j+c] = (+-)0.5*x[:, j]."""
    rows = jnp.arange(kc, dtype=jnp.int32)[:, None]
    cols = jnp.arange(2 * kc, dtype=jnp.int32)[None, :]
    onehot = (cols // 2 == rows).astype(jnp.float32)
    sign = jnp.where(cols % 2 == 0, 1.0, -1.0).astype(jnp.float32)
    u = 0.5 * onehot
    v = 0.5 * onehot * sign
    return u.astype(jnp.bfloat16), v.astype(jnp.bfloat16)


def _pick_tile_rows(h, w):
    """Largest row-tile dividing H that is a multiple of 8 (or == H) and keeps the
    double-buffered in+out blocks (~4x16*TH*W bytes) well inside scoped VMEM."""
    cap = max(8, (128 * 1024) // max(w, 1))   # ~2 MiB per (in or out) block
    if cap >= h:
        return h
    t = (cap // 8) * 8
    while t >= 8:
        if h % t == 0:
            return t
        t -= 8
    return h  # fallback: H has no multiple-of-8 divisor under the cap


def _reconstruction_forward_impl(x):
    """x: (N, 4, H, W) -> (N, 1, 2H, 2W) float32."""
    x = x.astype(jnp.float32)
    n, ch, h, w = x.shape
    assert ch == 4, "Reconstruction expects 4 subbands on dim 1"

    th = _pick_tile_rows(h, w)
    kc = 128 if w % 128 == 0 else w   # interleave chunk (matmul contraction) size
    u, v = _interleave_weights(kc)

    out_flat = pl.pallas_call(
        _recon_kernel,
        out_shape=jax.ShapeDtypeStruct((n, h, 4 * w), jnp.float32),
        grid=(n, h // th),
        in_specs=[
            pl.BlockSpec((1, 4, th, w), lambda i, j: (i, 0, j, 0)),
            pl.BlockSpec((kc, 2 * kc), lambda i, j: (0, 0)),
            pl.BlockSpec((kc, 2 * kc), lambda i, j: (0, 0)),
        ],
        out_specs=pl.BlockSpec((1, th, 4 * w), lambda i, j: (i, j, 0)),
        compiler_params=pltpu.CompilerParams(
            dimension_semantics=("parallel", "parallel"),
            vmem_limit_bytes=32 * 1024 * 1024,
        ),
    )(x, u, v)

    # Free reshape: (N, H, 4W) has identical linear layout to (N, 2H, 2W).
    return out_flat.reshape(n, 2 * h, 2 * w)[:, None, :, :]


reconstruction_forward = jax.jit(_reconstruction_forward_impl)


def _ref_forward(x):
    """Pure-JAX reference mirroring the PyTorch forward (for correctness check)."""
    s = SQRT_HALF
    x0, x1, x2, x3 = x[:, 0], x[:, 1], x[:, 2], x[:, 3]
    n, h, w = x0.shape
    a = s * (x0 + x1)
    b = s * (x0 - x1)
    c = s * (x2 + x3)
    d = s * (x2 - x3)
    low = jnp.zeros((n, 2 * h, w), jnp.float32).at[:, 0::2].set(a).at[:, 1::2].set(b)
    high = jnp.zeros((n, 2 * h, w), jnp.float32).at[:, 0::2].set(c).at[:, 1::2].set(d)
    ch0 = s * (low + high)
    ch1 = s * (low - high)
    res = (jnp.zeros((n, 2 * h, 2 * w), jnp.float32)
           .at[:, :, 0::2].set(ch0)
           .at[:, :, 1::2].set(ch1))
    return res[:, None]


if __name__ == "__main__":
    key = jax.random.PRNGKey(0)
    N, H, W = 2, 16, 16
    x = jax.random.normal(key, (N, 4, H, W), dtype=jnp.float32)

    out = reconstruction_forward(x)
    out = jax.block_until_ready(out)

    ref = _ref_forward(x)
    assert out.shape == (N, 1, 2 * H, 2 * W), out.shape
    max_err = float(jnp.max(jnp.abs(out - ref)))
    assert max_err < 1e-4, f"max abs error {max_err}"

    print("KERNEL_OK")
</pallas_src>

<mosaic_0001>
module attributes {stable_mosaic.version = 11 : i64} {
  func.func @_recon_kernel(%arg0: i32, %arg1: i32, %arg2: memref<1x4x16x16xf32, #tpu.memory_space<vmem>>, %arg3: memref<16x32xbf16, #tpu.memory_space<vmem>>, %arg4: memref<16x32xbf16, #tpu.memory_space<vmem>>, %arg5: memref<1x16x64xf32, #tpu.memory_space<vmem>>) attributes {dimension_semantics = [#tpu.dimension_semantics<parallel>, #tpu.dimension_semantics<parallel>], iteration_bounds = array<i64: 2, 1>, scalar_prefetch = 0 : i64, scratch_operands = 0 : i64, tpu.core_type = #tpu.core_type<tc>, window_params = [{transform_indices = @transform_0, window_bounds = array<i64: 1, 4, 16, 16>}, {pipeline_mode = #tpu.pipeline_mode<synchronous>, transform_indices = @transform_1, window_bounds = array<i64: 16, 32>}, {pipeline_mode = #tpu.pipeline_mode<synchronous>, transform_indices = @transform_2, window_bounds = array<i64: 16, 32>}, {transform_indices = @transform_3, window_bounds = array<i64: 1, 16, 64>}]} {
    %c0 = arith.constant 0 : index
    %c0_0 = arith.constant 0 : index
    %0 = vector.load %arg3[%c0, %c0_0] : memref<16x32xbf16, #tpu.memory_space<vmem>>, vector<16x32xbf16>
    %c0_1 = arith.constant 0 : index
    %c0_2 = arith.constant 0 : index
    %1 = vector.load %arg4[%c0_1, %c0_2] : memref<16x32xbf16, #tpu.memory_space<vmem>>, vector<16x32xbf16>
    %c0_3 = arith.constant 0 : index
    %c0_4 = arith.constant 0 : index
    %c0_5 = arith.constant 0 : index
    %c0_6 = arith.constant 0 : index
    %2 = vector.load %arg2[%c0_3, %c0_4, %c0_5, %c0_6] : memref<1x4x16x16xf32, #tpu.memory_space<vmem>>, vector<1x1x16x16xf32>
    %3 = vector.shape_cast %2 : vector<1x1x16x16xf32> to vector<16x16xf32>
    %c0_7 = arith.constant 0 : index
    %c1 = arith.constant 1 : index
    %c0_8 = arith.constant 0 : index
    %c0_9 = arith.constant 0 : index
    %4 = vector.load %arg2[%c0_7, %c1, %c0_8, %c0_9] : memref<1x4x16x16xf32, #tpu.memory_space<vmem>>, vector<1x1x16x16xf32>
    %5 = vector.shape_cast %4 : vector<1x1x16x16xf32> to vector<16x16xf32>
    %c0_10 = arith.constant 0 : index
    %c2 = arith.constant 2 : index
    %c0_11 = arith.constant 0 : index
    %c0_12 = arith.constant 0 : index
    %6 = vector.load %arg2[%c0_10, %c2, %c0_11, %c0_12] : memref<1x4x16x16xf32, #tpu.memory_space<vmem>>, vector<1x1x16x16xf32>
    %7 = vector.shape_cast %6 : vector<1x1x16x16xf32> to vector<16x16xf32>
    %c0_13 = arith.constant 0 : index
    %c3 = arith.constant 3 : index
    %c0_14 = arith.constant 0 : index
    %c0_15 = arith.constant 0 : index
    %8 = vector.load %arg2[%c0_13, %c3, %c0_14, %c0_15] : memref<1x4x16x16xf32, #tpu.memory_space<vmem>>, vector<1x1x16x16xf32>
    %9 = vector.shape_cast %8 : vector<1x1x16x16xf32> to vector<16x16xf32>
    %10 = arith.addf %3, %5 : vector<16x16xf32>
    %11 = arith.subf %3, %5 : vector<16x16xf32>
    %12 = arith.addf %7, %9 : vector<16x16xf32>
    %13 = arith.subf %7, %9 : vector<16x16xf32>
    %14 = arith.truncf %10 : vector<16x16xf32> to vector<16x16xbf16>
    %15 = arith.extf %14 : vector<16x16xbf16> to vector<16x16xf32>
    %16 = arith.subf %10, %15 : vector<16x16xf32>
    %17 = arith.truncf %16 : vector<16x16xf32> to vector<16x16xbf16>
    %18 = arith.extf %17 : vector<16x16xbf16> to vector<16x16xf32>
    %19 = arith.subf %16, %18 : vector<16x16xf32>
    %20 = arith.truncf %19 : vector<16x16xf32> to vector<16x16xbf16>
    %cst = arith.constant dense<0.000000e+00> : vector<16x32xf32>
    %21 = tpu.matmul %14, %0, %cst {dimension_numbers = #tpu.dot_dimension_numbers<[1], [0], [0], [1], [0, 0, 1, 1], [], []>} : vector<16x16xbf16>, vector<16x32xbf16>, vector<16x32xf32> -> vector<16x32xf32>
    %cst_16 = arith.constant dense<0.000000e+00> : vector<16x32xf32>
    %22 = tpu.matmul %17, %0, %cst_16 {dimension_numbers = #tpu.dot_dimension_numbers<[1], [0], [0], [1], [0, 0, 1, 1], [], []>} : vector<16x16xbf16>, vector<16x32xbf16>, vector<16x32xf32> -> vector<16x32xf32>
    %23 = arith.addf %21, %22 : vector<16x32xf32>
    %cst_17 = arith.constant dense<0.000000e+00> : vector<16x32xf32>
    %24 = tpu.matmul %20, %0, %cst_17 {dimension_numbers = #tpu.dot_dimension_numbers<[1], [0], [0], [1], [0, 0, 1, 1], [], []>} : vector<16x16xbf16>, vector<16x32xbf16>, vector<16x32xf32> -> vector<16x32xf32>
    %25 = arith.addf %23, %24 : vector<16x32xf32>
    %26 = arith.truncf %12 : vector<16x16xf32> to vector<16x16xbf16>
    %27 = arith.extf %26 : vector<16x16xbf16> to vector<16x16xf32>
    %28 = arith.subf %12, %27 : vector<16x16xf32>
    %29 = arith.truncf %28 : vector<16x16xf32> to vector<16x16xbf16>
    %30 = arith.extf %29 : vector<16x16xbf16> to vector<16x16xf32>
    %31 = arith.subf %28, %30 : vector<16x16xf32>
    %32 = arith.truncf %31 : vector<16x16xf32> to vector<16x16xbf16>
    %cst_18 = arith.constant dense<0.000000e+00> : vector<16x32xf32>
    %33 = tpu.matmul %26, %1, %cst_18 {dimension_numbers = #tpu.dot_dimension_numbers<[1], [0], [0], [1], [0, 0, 1, 1], [], []>} : vector<16x16xbf16>, vector<16x32xbf16>, vector<16x32xf32> -> vector<16x32xf32>
    %cst_19 = arith.constant dense<0.000000e+00> : vector<16x32xf32>
    %34 = tpu.matmul %29, %1, %cst_19 {dimension_numbers = #tpu.dot_dimension_numbers<[1], [0], [0], [1], [0, 0, 1, 1], [], []>} : vector<16x16xbf16>, vector<16x32xbf16>, vector<16x32xf32> -> vector<16x32xf32>
    %35 = arith.addf %33, %34 : vector<16x32xf32>
    %cst_20 = arith.constant dense<0.000000e+00> : vector<16x32xf32>
    %36 = tpu.matmul %32, %1, %cst_20 {dimension_numbers = #tpu.dot_dimension_numbers<[1], [0], [0], [1], [0, 0, 1, 1], [], []>} : vector<16x16xbf16>, vector<16x32xbf16>, vector<16x32xf32> -> vector<16x32xf32>
    %37 = arith.addf %35, %36 : vector<16x32xf32>
    %38 = arith.addf %25, %37 : vector<16x32xf32>
    %39 = arith.truncf %11 : vector<16x16xf32> to vector<16x16xbf16>
    %40 = arith.extf %39 : vector<16x16xbf16> to vector<16x16xf32>
    %41 = arith.subf %11, %40 : vector<16x16xf32>
    %42 = arith.truncf %41 : vector<16x16xf32> to vector<16x16xbf16>
    %43 = arith.extf %42 : vector<16x16xbf16> to vector<16x16xf32>
    %44 = arith.subf %41, %43 : vector<16x16xf32>
    %45 = arith.truncf %44 : vector<16x16xf32> to vector<16x16xbf16>
    %cst_21 = arith.constant dense<0.000000e+00> : vector<16x32xf32>
    %46 = tpu.matmul %39, %0, %cst_21 {dimension_numbers = #tpu.dot_dimension_numbers<[1], [0], [0], [1], [0, 0, 1, 1], [], []>} : vector<16x16xbf16>, vector<16x32xbf16>, vector<16x32xf32> -> vector<16x32xf32>
    %cst_22 = arith.constant dense<0.000000e+00> : vector<16x32xf32>
    %47 = tpu.matmul %42, %0, %cst_22 {dimension_numbers = #tpu.dot_dimension_numbers<[1], [0], [0], [1], [0, 0, 1, 1], [], []>} : vector<16x16xbf16>, vector<16x32xbf16>, vector<16x32xf32> -> vector<16x32xf32>
    %48 = arith.addf %46, %47 : vector<16x32xf32>
    %cst_23 = arith.constant dense<0.000000e+00> : vector<16x32xf32>
    %49 = tpu.matmul %45, %0, %cst_23 {dimension_numbers = #tpu.dot_dimension_numbers<[1], [0], [0], [1], [0, 0, 1, 1], [], []>} : vector<16x16xbf16>, vector<16x32xbf16>, vector<16x32xf32> -> vector<16x32xf32>
    %50 = arith.addf %48, %49 : vector<16x32xf32>
    %51 = arith.truncf %13 : vector<16x16xf32> to vector<16x16xbf16>
    %52 = arith.extf %51 : vector<16x16xbf16> to vector<16x16xf32>
    %53 = arith.subf %13, %52 : vector<16x16xf32>
    %54 = arith.truncf %53 : vector<16x16xf32> to vector<16x16xbf16>
    %55 = arith.extf %54 : vector<16x16xbf16> to vector<16x16xf32>
    %56 = arith.subf %53, %55 : vector<16x16xf32>
    %57 = arith.truncf %56 : vector<16x16xf32> to vector<16x16xbf16>
    %cst_24 = arith.constant dense<0.000000e+00> : vector<16x32xf32>
    %58 = tpu.matmul %51, %1, %cst_24 {dimension_numbers = #tpu.dot_dimension_numbers<[1], [0], [0], [1], [0, 0, 1, 1], [], []>} : vector<16x16xbf16>, vector<16x32xbf16>, vector<16x32xf32> -> vector<16x32xf32>
    %cst_25 = arith.constant dense<0.000000e+00> : vector<16x32xf32>
    %59 = tpu.matmul %54, %1, %cst_25 {dimension_numbers = #tpu.dot_dimension_numbers<[1], [0], [0], [1], [0, 0, 1, 1], [], []>} : vector<16x16xbf16>, vector<16x32xbf16>, vector<16x32xf32> -> vector<16x32xf32>
    %60 = arith.addf %58, %59 : vector<16x32xf32>
    %cst_26 = arith.constant dense<0.000000e+00> : vector<16x32xf32>
    %61 = tpu.matmul %57, %1, %cst_26 {dimension_numbers = #tpu.dot_dimension_numbers<[1], [0], [0], [1], [0, 0, 1, 1], [], []>} : vector<16x16xbf16>, vector<16x32xbf16>, vector<16x32xf32> -> vector<16x32xf32>
    %62 = arith.addf %60, %61 : vector<16x32xf32>
    %63 = arith.addf %50, %62 : vector<16x32xf32>
    %c0_27 = arith.constant 0 : index
    %c0_28 = arith.constant 0 : index
    %c0_29 = arith.constant 0 : index
    %64 = vector.load %arg5[%c0_27, %c0_28, %c0_29] : memref<1x16x64xf32, #tpu.memory_space<vmem>>, vector<1x16x32xf32>
    %65 = vector.shape_cast %64 : vector<1x16x32xf32> to vector<16x32xf32>
    %66 = vector.shape_cast %38 : vector<16x32xf32> to vector<1x16x32xf32>
    tpu.vector_store %arg5[%c0_27, %c0_28, %c0_29], %66 {strides = array<i32>} : memref<1x16x64xf32, #tpu.memory_space<vmem>>, vector<1x16x32xf32>,
    %c0_30 = arith.constant 0 : index
    %c0_31 = arith.constant 0 : index
    %c32 = arith.constant 32 : index
    %67 = vector.load %arg5[%c0_30, %c0_31, %c32] : memref<1x16x64xf32, #tpu.memory_space<vmem>>, vector<1x16x32xf32>
    %68 = vector.shape_cast %67 : vector<1x16x32xf32> to vector<16x32xf32>
    %69 = vector.shape_cast %63 : vector<16x32xf32> to vector<1x16x32xf32>
    tpu.vector_store %arg5[%c0_30, %c0_31, %c32], %69 {strides = array<i32>} : memref<1x16x64xf32, #tpu.memory_space<vmem>>, vector<1x16x32xf32>,
    return
  }
  func.func @transform_0(%arg0: i32, %arg1: i32) -> (i32, i32, i32, i32) {
    %c0_i32 = arith.constant 0 : i32
    %c0_i32_0 = arith.constant 0 : i32
    %c0_i32_1 = arith.constant 0 : i32
    return %arg0, %c0_i32, %arg1, %c0_i32_0 : i32, i32, i32, i32
  }
  func.func @transform_1(%arg0: i32, %arg1: i32) -> (i32, i32) {
    %c0_i32 = arith.constant 0 : i32
    %c0_i32_0 = arith.constant 0 : i32
    %c0_i32_1 = arith.constant 0 : i32
    return %c0_i32, %c0_i32_0 : i32, i32
  }
  func.func @transform_2(%arg0: i32, %arg1: i32) -> (i32, i32) {
    %c0_i32 = arith.constant 0 : i32
    %c0_i32_0 = arith.constant 0 : i32
    %c0_i32_1 = arith.constant 0 : i32
    return %c0_i32, %c0_i32_0 : i32, i32
  }
  func.func @transform_3(%arg0: i32, %arg1: i32) -> (i32, i32, i32) {
    %c0_i32 = arith.constant 0 : i32
    %c0_i32_0 = arith.constant 0 : i32
    return %arg0, %arg1, %c0_i32 : i32, i32, i32
  }
}

</mosaic_0001>

<llo_original>
// kernel: _reconstruction_forward_impl.1
$region0: #{_reconstruction_forward_impl.1}
  #allocation0 [shape = 'u32[]', space=smem, size = 0x4, offset = 0x4, fixed_abs, tag = 'smem constant byte address 0x4 - core index']
  #allocation1 [shape = 'u32[144,128]{1,0:T(1,128)}', space=vmem, size = 0x12000, scoped, tag = 'internal scratch']
  %s0 = inlined_call_operand.hbm [shape: f32[2,4,16,16], index: 0, kind: input, shape index: {}]
  %s1 = inlined_call_operand.vmem [shape: bf16[16,32], index: 1, kind: input, shape index: {}]
  %s2 = inlined_call_operand.vmem [shape: bf16[16,32], index: 2, kind: input, shape index: {}]
  %s3 = inlined_call_operand.vmem [shape: f32[2,16,64], index: 3, kind: output, shape index: {}]
  %s4 = sld [smem:[#allocation0]]
  $region49: #{_reconstruction_forward_impl.1} parent=0
    _
  %s6 = ssub.s32 1, %s4
  %s7 = scalar_select 0, %s6, %s4
  $region1: #{_reconstruction_forward_impl.1} parent=0
    #allocation2 [shape = 'u8[65536]{0}', space=vmem, size = 0x10000, scoped, tag = 'input window, operand 0']
    #allocation3 [shape = 's32[2]{0}', space=sflag, size = 0x8, scoped, tag = 'scoped memory for _reconstruction_forward_impl.1']
    %8 = vsyncpa [#allocation3], 0
    %s9 = scalar_lea.sflag [#allocation3], 1
    %10 = vsyncpa %s9, 0
    loop: start=0, step=1, limit=4
    $region2: #{_reconstruction_forward_impl.1} parent=1 // loop_pre_header
      _
    $region3: #{_reconstruction_forward_impl.1} parent=1 // loop_header
      %s12 = sphi 0, %s16
      %p13 = scmp.ge.s32.totalorder %s12, 4
      %s19 = sphi 0, %s31
      %s20 = sphi 0, %s27
      %s21 = sphi 0, %s19
      %s22 = sphi 0, %s20
      %s23 = sphi 0, %s21
      %s24 = sphi 0, %s22
      %s36 = sphi 0, %s38
      %s39 = sphi 0, %s36
      %s40 = sphi 0, %s39
      %s56 = sphi 0, %s40
      %s60 = sphi 0, %s60
      %s62 = sphi 0, %s60
      %s63 = sphi 0, %s62
      %s77 = sphi 0, %s63
      %s81 = sphi 0, %s81
      %s83 = sphi 0, %s81
      %s84 = sphi 0, %s83
      %s98 = sphi 0, %s84
      %s106 = sphi 0, %s108
      %s109 = sphi 0, %s106
      %s110 = sphi 0, %s109
      %s126 = sphi 0, %s110
    $region4: #{_reconstruction_forward_impl.1} parent=1 // loop_header_branch
      %15 = sbr.rel (%p13) target = $region8
    $region5: #{_reconstruction_forward_impl.1} parent=1 // loop_body
      %s17 = ssub.s32 %s12, 1
      %s18 = ssub.s32 %s12, 2
      %s25 = sadd.s32 1, %s20
      %p26 = scmp.ge.s32.totalorder %s25, 1
      %s27 = scalar_select %p26, 0, %s25
      %s28 = sadd.s32 1, %s19
      %s29 = scalar_select %p26, %s28, %s19
      %p30 = scmp.ge.s32.totalorder %s29, 2
      %s31 = scalar_select %p30, 0, %s29
      %s32 = ssub.s32 %s19, %s31
      %s33 = ssub.s32 %s20, %s27
      %s34 = sor.u32 %s32, %s33
      %p35 = scmp.eq.s32.totalorder %s34, 0
      %s37 = sadd.s32 %s36, 1
      %s38 = scalar_select %p35, %s36, %s37
      %p41 = pneg %p35
      %p42 = scmp.eq.s32.totalorder %s12, 1
      %p43 = por %p41, %p42
      %p44 = scmp.ne.s32.totalorder %s36, %s39
      %p45 = scmp.eq.s32.totalorder %s12, 0
      %p46 = por %p44, %p45
      %p47 = scmp.ne.s32.totalorder %s36, %s39
      %p48 = scmp.eq.s32.totalorder %s17, 1
      %p49 = por %p47, %p48
      %p50 = scmp.ne.s32.totalorder %s39, %s40
      %p51 = scmp.eq.s32.totalorder %s17, 0
      %p52 = por %p50, %p51
      %p53 = scmp.ne.s32.totalorder %s39, %s40
      %p54 = scmp.eq.s32.totalorder %s18, 1
      %p55 = por %p53, %p54
      %p57 = scmp.ne.s32.totalorder %s40, %s56
      %p58 = scmp.eq.s32.totalorder %s18, 0
      %p59 = por %p57, %p58
      %s61 = sadd.s32 %s60, 1
      %p64 = scmp.eq.s32.totalorder %s12, 1
      %p65 = scmp.ne.s32.totalorder %s60, %s62
      %p66 = scmp.eq.s32.totalorder %s12, 0
      %p67 = por %p65, %p66
      %p68 = scmp.ne.s32.totalorder %s60, %s62
      %p69 = scmp.eq.s32.totalorder %s17, 1
      %p70 = por %p68, %p69
      %p71 = scmp.ne.s32.totalorder %s62, %s63
      %p72 = scmp.eq.s32.totalorder %s17, 0
      %p73 = por %p71, %p72
      %p74 = scmp.ne.s32.totalorder %s62, %s63
      %p75 = scmp.eq.s32.totalorder %s18, 1
      %p76 = por %p74, %p75
      %p78 = scmp.ne.s32.totalorder %s63, %s77
      %p79 = scmp.eq.s32.totalorder %s18, 0
      %p80 = por %p78, %p79
      %s82 = sadd.s32 %s81, 1
      %p85 = scmp.eq.s32.totalorder %s12, 1
      %p86 = scmp.ne.s32.totalorder %s81, %s83
      %p87 = scmp.eq.s32.totalorder %s12, 0
      %p88 = por %p86, %p87
      %p89 = scmp.ne.s32.totalorder %s81, %s83
      %p90 = scmp.eq.s32.totalorder %s17, 1
      %p91 = por %p89, %p90
      %p92 = scmp.ne.s32.totalorder %s83, %s84
      %p93 = scmp.eq.s32.totalorder %s17, 0
      %p94 = por %p92, %p93
      %p95 = scmp.ne.s32.totalorder %s83, %s84
      %p96 = scmp.eq.s32.totalorder %s18, 1
      %p97 = por %p95, %p96
      %p99 = scmp.ne.s32.totalorder %s84, %s98
      %p100 = scmp.eq.s32.totalorder %s18, 0
      %p101 = por %p99, %p100
      %s102 = ssub.s32 %s19, %s31
      %s103 = ssub.s32 %s20, %s27
      %s104 = sor.u32 %s102, %s103
      %p105 = scmp.eq.s32.totalorder %s104, 0
      %s107 = sadd.s32 %s106, 1
      %s108 = scalar_select %p105, %s106, %s107
      %p111 = pneg %p105
      %p112 = scmp.eq.s32.totalorder %s12, 1
      %p113 = por %p111, %p112
      %p114 = scmp.ne.s32.totalorder %s106, %s109
      %p115 = scmp.eq.s32.totalorder %s12, 0
      %p116 = por %p114, %p115
      %p117 = scmp.ne.s32.totalorder %s106, %s109
      %p118 = scmp.eq.s32.totalorder %s17, 1
      %p119 = por %p117, %p118
      %p120 = scmp.ne.s32.totalorder %s109, %s110
      %p121 = scmp.eq.s32.totalorder %s17, 0
      %p122 = por %p120, %p121
      %p123 = scmp.ne.s32.totalorder %s109, %s110
      %p124 = scmp.eq.s32.totalorder %s18, 1
      %p125 = por %p123, %p124
      %p127 = scmp.ne.s32.totalorder %s110, %s126
      %p128 = scmp.eq.s32.totalorder %s18, 0
      %p129 = por %p127, %p128
      %p130 = scmp.le.s32.totalorder 1, %s12
      %p131 = scmp.lt.s32.totalorder %s12, 3
      %p132 = pnand %p130, %p131
      %p133 = pneg %p132
      // Predicated region
      $region9: #{_reconstruction_forward_impl.1} parent=5 // pred_check
        _
      $region10: #{_reconstruction_forward_impl.1} parent=5 // pred_check_branch
        %135 = sbr.rel (%p132) target = $region12
      $region11: #{_reconstruction_forward_impl.1} parent=5 // pred_region
        %s136 = ssub.s32 %s12, 1
        // Predicated region
        $region13: #{_reconstruction_forward_impl.1} parent=11 // pred_check
          %p137 = pneg %p73
        $region14: #{_reconstruction_forward_impl.1} parent=11 // pred_check_branch
          %139 = sbr.rel (%p137) target = $region16
        $region15: #{_reconstruction_forward_impl.1} parent=11 // pred_region
          _
        $region16: #{_reconstruction_forward_impl.1} parent=11 // pred_fallthru
          _
        // Predicated region
        $region17: #{_reconstruction_forward_impl.1} parent=11 // pred_check
          %p140 = pneg %p94
        $region18: #{_reconstruction_forward_impl.1} parent=11 // pred_check_branch
          %142 = sbr.rel (%p140) target = $region20
        $region19: #{_reconstruction_forward_impl.1} parent=11 // pred_region
          _
        $region20: #{_reconstruction_forward_impl.1} parent=11 // pred_fallthru
          _
      $region12: #{_reconstruction_forward_impl.1} parent=5 // pred_fallthru
        _
      %p143 = scmp.lt.s32.totalorder %s12, 2
      // Predicated region
      $region21: #{_reconstruction_forward_impl.1} parent=5 // pred_check
        %p144 = pneg %p143
      $region22: #{_reconstruction_forward_impl.1} parent=5 // pred_check_branch
        %146 = sbr.rel (%p144) target = $region24
      $region23: #{_reconstruction_forward_impl.1} parent=5 // pred_region
        // Predicated region
        $region25: #{_reconstruction_forward_impl.1} parent=23 // pred_check
          %p147 = pneg %p46
        $region26: #{_reconstruction_forward_impl.1} parent=23 // pred_check_branch
          %149 = sbr.rel (%p147) target = $region28
        $region27: #{_reconstruction_forward_impl.1} parent=23 // pred_region
          %s150 = sand.u32 %s36, 1
          %s151 = scalar_lea.sflag [#allocation3], %s150
          %s152 = sand.u32 %s36, 1
          %s153 = smul.addr %s152, 64
          %s154 = scalar_lea.vmem [#allocation2], %s153
          %s155 = smul.u32 2, %s20
          %s157 = ssub.s32 1024, 1024
          %158 = vsyncadd %s151, %s157
          %s159 = smul.addr %s19, 8
          %s160 = sadd.s32 %s155, %s159
          %s161 = smul.addr %s160, 128
          %s162 = scalar_lea.hbm %s0, %s161
          %s163 = sshll.u32 %s154, 4
          %s164 = int_to_ptr.vmem [resolvable:$true] %s163
          %169 = dma.hbm_to_vmem [thread:$0]  %s162, 1024, %s164, %s151, 128, 128, 8
        $region28: #{_reconstruction_forward_impl.1} parent=23 // pred_fallthru
          _
      $region24: #{_reconstruction_forward_impl.1} parent=5 // pred_fallthru
        _
      %p170 = scmp.le.s32.totalorder 1, %s12
      %p171 = scmp.lt.s32.totalorder %s12, 3
      %p172 = pnand %p170, %p171
      %p173 = pneg %p172
      // Predicated region
      $region29: #{_reconstruction_forward_impl.1} parent=5 // pred_check
        _
      $region30: #{_reconstruction_forward_impl.1} parent=5 // pred_check_branch
        %175 = sbr.rel (%p172) target = $region32
      $region31: #{_reconstruction_forward_impl.1} parent=5 // pred_region
        %s176 = ssub.s32 %s12, 1
        %s177 = sand.u32 %s39, 1
        %s178 = scalar_lea.sflag [#allocation3], %s177
        %s179 = sand.u32 %s39, 1
        %s180 = smul.addr %s179, 64
        %s181 = scalar_lea.vmem [#allocation2], %s180
        // Predicated region
        $region33: #{_reconstruction_forward_impl.1} parent=31 // pred_check
          %p182 = pneg %p52
        $region34: #{_reconstruction_forward_impl.1} parent=31 // pred_check_branch
          %184 = sbr.rel (%p182) target = $region36
        $region35: #{_reconstruction_forward_impl.1} parent=31 // pred_region
          %185 = dma.done %s178, 1024
        $region36: #{_reconstruction_forward_impl.1} parent=31 // pred_fallthru
          _
        %s186 = sand.u32 %s39, 1
        %s187 = scalar_lea.sflag [#allocation3], %s186
        %s188 = sand.u32 %s39, 1
        %s189 = smul.addr %s188, 64
        %s190 = scalar_lea.vmem [#allocation2], %s189
        %p191 = pneg %p52
        %p192 = pneg %p49
        %p193 = pneg %p73
        %p194 = pneg %p70
        %p195 = pneg %p94
        %p196 = pneg %p91
        %p197 = pneg %p122
        %p198 = pneg %p119
        %s199 = smul.u32 2, %s22
        %p200 = scmp.lt.s32.totalorder %s21, 1
        %s201 = scalar_select %p200, %s21, 1
        %p202 = scmp.lt.s32.totalorder %s199, 1
        %s203 = scalar_select %p202, %s199, 1
        %s204 = smul.addr %s201, 2
        %s205 = sadd.s32 %s203, %s204
        %s206 = smul.addr %s205, 8
        %s207 = scalar_lea.vmem %s3, %s206
        %s208 = smul.u32 2, %s22
        %s209 = smul.u32 2, %s22
        %p210 = scmp.lt.s32.totalorder %s21, 1
        %s211 = scalar_select %p210, %s21, 1
        %p212 = scmp.lt.s32.totalorder %s209, 1
        %s213 = scalar_select %p212, %s209, 1
        %s214 = smul.addr %s211, 2
        %s215 = sadd.s32 %s213, %s214
        %s216 = smul.addr %s215, 8
        %s217 = scalar_lea.vmem %s3, %s216
        %s218 = smul.u32 2, %s22
        %v220 = vld [vmem:[%s1] sm:$0xf]
        %v221 = vld [vmem:[%s1 + $0x4] sm:$0xf]
        %v222 = vld [vmem:[%s2] sm:$0xf]
        %v223 = vld [vmem:[%s2 + $0x4] sm:$0xf]
        %v224 = vld [vmem:[%s181] sm:$0xff]
        %v225 = vld [vmem:[%s181 + $0x8] sm:$0xff]
        %s226 = scalar_lea.vmem %s181, 16 [#allocation2]
        %v227 = vld [vmem:[%s226] sm:$0xff]
        %v228 = vld [vmem:[%s226 + $0x8] sm:$0xff]
        %s229 = scalar_lea.vmem %s181, 32 [#allocation2]
        %v230 = vld [vmem:[%s229] sm:$0xff]
        %v231 = vld [vmem:[%s229 + $0x8] sm:$0xff]
        %s232 = scalar_lea.vmem %s181, 48 [#allocation2]
        %v233 = vld [vmem:[%s232] sm:$0xff]
        %v234 = vld [vmem:[%s232 + $0x8] sm:$0xff]
        %v235 = vadd.f32 %v224, %v227
        %v236 = vadd.f32 %v225, %v228
        %v237 = vsub.f32 %v224, %v227
        %v238 = vsub.f32 %v225, %v228
        %v239 = vadd.f32 %v230, %v233
        %v240 = vadd.f32 %v231, %v234
        %v241 = vsub.f32 %v230, %v233
        %v242 = vsub.f32 %v231, %v234
        %v243 = vpack.c.bf16 %v236, %v235
        %v244 = vunpack.c.l.bf16 %v243
        %v245 = vunpack.c.h.bf16 %v243
        %v246 = vsub.f32 %v235, %v244
        %v247 = vsub.f32 %v236, %v245
        %v248 = vpack.c.bf16 %v247, %v246
        %v249 = vunpack.c.l.bf16 %v248
        %v250 = vunpack.c.h.bf16 %v248
        %v251 = vsub.f32 %v246, %v249
        %v252 = vsub.f32 %v247, %v250
        %v253 = vpack.c.bf16 %v252, %v251
        %v256 = vunpack.c.l.b16 %v220
        %v257 = vunpack.c.l.b16 %v221
        %v258 = vpack.c.b16 %v257, %v256
        %vm260 = vcmask 130048
        %v262 = vsel %vm260, %v248, 0
        %264 = vmatprep.subr.bf16.mxu0 0
        %265 = vmatpush1.bf16.msra.mxu0 0
        %266 = vmatprep.subr.bf16.mxu0 0
        %267 = vmatpush1.bf16.msra.mxu0 0
        %268 = vmatprep.subr.bf16.mxu0 0
        %269 = vmatpush1.bf16.msra.mxu0 0
        %270 = vmatprep.subr.bf16.mxu0 0
        %271 = vmatpush1.bf16.msra.mxu0 0
        %272 = vmatprep.subr.bf16.mxu0 0
        %273 = vmatpush1.bf16.msra.mxu0 0
        %274 = vmatprep.subr.bf16.mxu0 0
        %275 = vmatpush1.bf16.msra.mxu0 0
        %276 = vmatprep.subr.bf16.mxu0 0
        %277 = vmatpush1.bf16.msra.mxu0 0
        %278 = vmatprep.subr.bf16.mxu0 0
        %279 = vmatpush1.bf16.msra.mxu0 %v258
        %280 = vmatprep.subr.bf16.mxu0 0
        %281 = vmatpush2.bf16.msra.mxu0 0
        %282 = vmatprep.subr.bf16.mxu0 0
        %283 = vmatpush2.bf16.msra.mxu0 0
        %284 = vmatprep.subr.bf16.mxu0 0
        %285 = vmatpush2.bf16.msra.mxu0 0
        %286 = vmatprep.subr.bf16.mxu0 0
        %287 = vmatpush2.bf16.msra.mxu0 0
        %288 = vmatprep.subr.bf16.mxu0 0
        %289 = vmatpush2.bf16.msra.mxu0 0
        %290 = vmatprep.subr.bf16.mxu0 0
        %291 = vmatpush2.bf16.msra.mxu0 0
        %292 = vmatprep.subr.bf16.mxu0 0
        %293 = vmatpush2.bf16.msra.mxu0 0
        %294 = vmatprep.subr.bf16.mxu0 0
        %295 = vmatpush2.bf16.msra.mxu0 0
        %296 = vmatprep.mubr.bf16.mxu0 0
        %297 = vmatmul.mubr.bf16.gmra.mxu0 %v262
        %v298 = vpop.f32.mrf.mxu0
        %v299 = vadd.f32 0.0, %v298
        %v300 = vpop.f32.mrf.mxu0
        %v301 = vpop.f32.mrf.mxu0
        %v302 = vadd.f32 0.0, %v301
        %v303 = vpop.f32.mrf.mxu0
        %304 = vdwg.mxu0
        %v306 = vsel %vm260, %v243, 0
        %308 = vmatprep.subr.bf16.mxu0 0
        %309 = vmatpush1.bf16.msra.mxu0 0
        %310 = vmatprep.subr.bf16.mxu0 0
        %311 = vmatpush1.bf16.msra.mxu0 0
        %312 = vmatprep.subr.bf16.mxu0 0
        %313 = vmatpush1.bf16.msra.mxu0 0
        %314 = vmatprep.subr.bf16.mxu0 0
        %315 = vmatpush1.bf16.msra.mxu0 0
        %316 = vmatprep.subr.bf16.mxu0 0
        %317 = vmatpush1.bf16.msra.mxu0 0
        %318 = vmatprep.subr.bf16.mxu0 0
        %319 = vmatpush1.bf16.msra.mxu0 0
        %320 = vmatprep.subr.bf16.mxu0 0
        %321 = vmatpush1.bf16.msra.mxu0 0
        %322 = vmatprep.subr.bf16.mxu0 0
        %323 = vmatpush1.bf16.msra.mxu0 %v258
        %324 = vmatprep.subr.bf16.mxu0 0
        %325 = vmatpush2.bf16.msra.mxu0 0
        %326 = vmatprep.subr.bf16.mxu0 0
        %327 = vmatpush2.bf16.msra.mxu0 0
        %328 = vmatprep.subr.bf16.mxu0 0
        %329 = vmatpush2.bf16.msra.mxu0 0
        %330 = vmatprep.subr.bf16.mxu0 0
        %331 = vmatpush2.bf16.msra.mxu0 0
        %332 = vmatprep.subr.bf16.mxu0 0
        %333 = vmatpush2.bf16.msra.mxu0 0
        %334 = vmatprep.subr.bf16.mxu0 0
        %335 = vmatpush2.bf16.msra.mxu0 0
        %336 = vmatprep.subr.bf16.mxu0 0
        %337 = vmatpush2.bf16.msra.mxu0 0
        %338 = vmatprep.subr.bf16.mxu0 0
        %339 = vmatpush2.bf16.msra.mxu0 0
        %340 = vmatprep.mubr.bf16.mxu0 0
        %341 = vmatmul.mubr.bf16.gmra.mxu0 %v306
        %v342 = vpop.f32.mrf.mxu0
        %v343 = vadd.f32 %v299, %v342
        %v344 = vpop.f32.mrf.mxu0
        %v345 = vpop.f32.mrf.mxu0
        %v346 = vadd.f32 %v302, %v345
        %v347 = vpop.f32.mrf.mxu0
        %348 = vdwg.mxu0
        %v350 = vsel %vm260, %v253, 0
        %352 = vmatprep.subr.bf16.mxu0 0
        %353 = vmatpush1.bf16.msra.mxu0 0
        %354 = vmatprep.subr.bf16.mxu0 0
        %355 = vmatpush1.bf16.msra.mxu0 0
        %356 = vmatprep.subr.bf16.mxu0 0
        %357 = vmatpush1.bf16.msra.mxu0 0
        %358 = vmatprep.subr.bf16.mxu0 0
        %359 = vmatpush1.bf16.msra.mxu0 0
        %360 = vmatprep.subr.bf16.mxu0 0
        %361 = vmatpush1.bf16.msra.mxu0 0
        %362 = vmatprep.subr.bf16.mxu0 0
        %363 = vmatpush1.bf16.msra.mxu0 0
        %364 = vmatprep.subr.bf16.mxu0 0
        %365 = vmatpush1.bf16.msra.mxu0 0
        %366 = vmatprep.subr.bf16.mxu0 0
        %367 = vmatpush1.bf16.msra.mxu0 %v258
        %368 = vmatprep.subr.bf16.mxu0 0
        %369 = vmatpush2.bf16.msra.mxu0 0
        %370 = vmatprep.subr.bf16.mxu0 0
        %371 = vmatpush2.bf16.msra.mxu0 0
        %372 = vmatprep.subr.bf16.mxu0 0
        %373 = vmatpush2.bf16.msra.mxu0 0
        %374 = vmatprep.subr.bf16.mxu0 0
        %375 = vmatpush2.bf16.msra.mxu0 0
        %376 = vmatprep.subr.bf16.mxu0 0
        %377 = vmatpush2.bf16.msra.mxu0 0
        %378 = vmatprep.subr.bf16.mxu0 0
        %379 = vmatpush2.bf16.msra.mxu0 0
        %380 = vmatprep.subr.bf16.mxu0 0
        %381 = vmatpush2.bf16.msra.mxu0 0
        %382 = vmatprep.subr.bf16.mxu0 0
        %383 = vmatpush2.bf16.msra.mxu0 0
        %384 = vmatprep.mubr.bf16.mxu0 0
        %385 = vmatmul.mubr.bf16.gmra.mxu0 %v350
        %v386 = vpop.f32.mrf.mxu0
        %v387 = vadd.f32 0.0, %v386
        %v388 = vpop.f32.mrf.mxu0
        %v389 = vpop.f32.mrf.mxu0
        %v390 = vadd.f32 0.0, %v389
        %v391 = vpop.f32.mrf.mxu0
        %392 = vdwg.mxu0
        %v393 = vadd.f32 %v343, %v387
        %v394 = vadd.f32 %v346, %v390
        %v395 = vpack.c.bf16 %v240, %v239
        %v396 = vunpack.c.l.bf16 %v395
        %v397 = vunpack.c.h.bf16 %v395
        %v398 = vsub.f32 %v239, %v396
        %v399 = vsub.f32 %v240, %v397
        %v400 = vpack.c.bf16 %v399, %v398
        %v401 = vunpack.c.l.bf16 %v400
        %v402 = vunpack.c.h.bf16 %v400
        %v403 = vsub.f32 %v398, %v401
        %v404 = vsub.f32 %v399, %v402
        %v405 = vpack.c.bf16 %v404, %v403
        %v408 = vunpack.c.l.b16 %v222
        %v409 = vunpack.c.l.b16 %v223
        %v410 = vpack.c.b16 %v409, %v408
        %v413 = vsel %vm260, %v400, 0
        %415 = vmatprep.subr.bf16.mxu0 0
        %416 = vmatpush1.bf16.msra.mxu0 0
        %417 = vmatprep.subr.bf16.mxu0 0
        %418 = vmatpush1.bf16.msra.mxu0 0
        %419 = vmatprep.subr.bf16.mxu0 0
        %420 = vmatpush1.bf16.msra.mxu0 0
        %421 = vmatprep.subr.bf16.mxu0 0
        %422 = vmatpush1.bf16.msra.mxu0 0
        %423 = vmatprep.subr.bf16.mxu0 0
        %424 = vmatpush1.bf16.msra.mxu0 0
        %425 = vmatprep.subr.bf16.mxu0 0
        %426 = vmatpush1.bf16.msra.mxu0 0
        %427 = vmatprep.subr.bf16.mxu0 0
        %428 = vmatpush1.bf16.msra.mxu0 0
        %429 = vmatprep.subr.bf16.mxu0 0
        %430 = vmatpush1.bf16.msra.mxu0 %v410
        %431 = vmatprep.subr.bf16.mxu0 0
        %432 = vmatpush2.bf16.msra.mxu0 0
        %433 = vmatprep.subr.bf16.mxu0 0
        %434 = vmatpush2.bf16.msra.mxu0 0
        %435 = vmatprep.subr.bf16.mxu0 0
        %436 = vmatpush2.bf16.msra.mxu0 0
        %437 = vmatprep.subr.bf16.mxu0 0
        %438 = vmatpush2.bf16.msra.mxu0 0
        %439 = vmatprep.subr.bf16.mxu0 0
        %440 = vmatpush2.bf16.msra.mxu0 0
        %441 = vmatprep.subr.bf16.mxu0 0
        %442 = vmatpush2.bf16.msra.mxu0 0
        %443 = vmatprep.subr.bf16.mxu0 0
        %444 = vmatpush2.bf16.msra.mxu0 0
        %445 = vmatprep.subr.bf16.mxu0 0
        %446 = vmatpush2.bf16.msra.mxu0 0
        %447 = vmatprep.mubr.bf16.mxu0 0
        %448 = vmatmul.mubr.bf16.gmra.mxu0 %v413
        %v449 = vpop.f32.mrf.mxu0
        %v450 = vadd.f32 0.0, %v449
        %v451 = vpop.f32.mrf.mxu0
        %v452 = vpop.f32.mrf.mxu0
        %v453 = vadd.f32 0.0, %v452
        %v454 = vpop.f32.mrf.mxu0
        %455 = vdwg.mxu0
        %v457 = vsel %vm260, %v395, 0
        %459 = vmatprep.subr.bf16.mxu0 0
        %460 = vmatpush1.bf16.msra.mxu0 0
        %461 = vmatprep.subr.bf16.mxu0 0
        %462 = vmatpush1.bf16.msra.mxu0 0
        %463 = vmatprep.subr.bf16.mxu0 0
        %464 = vmatpush1.bf16.msra.mxu0 0
        %465 = vmatprep.subr.bf16.mxu0 0
        %466 = vmatpush1.bf16.msra.mxu0 0
        %467 = vmatprep.subr.bf16.mxu0 0
        %468 = vmatpush1.bf16.msra.mxu0 0
        %469 = vmatprep.subr.bf16.mxu0 0
        %470 = vmatpush1.bf16.msra.mxu0 0
        %471 = vmatprep.subr.bf16.mxu0 0
        %472 = vmatpush1.bf16.msra.mxu0 0
        %473 = vmatprep.subr.bf16.mxu0 0
        %474 = vmatpush1.bf16.msra.mxu0 %v410
        %475 = vmatprep.subr.bf16.mxu0 0
        %476 = vmatpush2.bf16.msra.mxu0 0
        %477 = vmatprep.subr.bf16.mxu0 0
        %478 = vmatpush2.bf16.msra.mxu0 0
        %479 = vmatprep.subr.bf16.mxu0 0
        %480 = vmatpush2.bf16.msra.mxu0 0
        %481 = vmatprep.subr.bf16.mxu0 0
        %482 = vmatpush2.bf16.msra.mxu0 0
        %483 = vmatprep.subr.bf16.mxu0 0
        %484 = vmatpush2.bf16.msra.mxu0 0
        %485 = vmatprep.subr.bf16.mxu0 0
        %486 = vmatpush2.bf16.msra.mxu0 0
        %487 = vmatprep.subr.bf16.mxu0 0
        %488 = vmatpush2.bf16.msra.mxu0 0
        %489 = vmatprep.subr.bf16.mxu0 0
        %490 = vmatpush2.bf16.msra.mxu0 0
        %491 = vmatprep.mubr.bf16.mxu0 0
        %492 = vmatmul.mubr.bf16.gmra.mxu0 %v457
        %v493 = vpop.f32.mrf.mxu0
        %v494 = vadd.f32 %v450, %v493
        %v495 = vpop.f32.mrf.mxu0
        %v496 = vpop.f32.mrf.mxu0
        %v497 = vadd.f32 %v453, %v496
        %v498 = vpop.f32.mrf.mxu0
        %499 = vdwg.mxu0
        %v501 = vsel %vm260, %v405, 0
        %503 = vmatprep.subr.bf16.mxu0 0
        %504 = vmatpush1.bf16.msra.mxu0 0
        %505 = vmatprep.subr.bf16.mxu0 0
        %506 = vmatpush1.bf16.msra.mxu0 0
        %507 = vmatprep.subr.bf16.mxu0 0
        %508 = vmatpush1.bf16.msra.mxu0 0
        %509 = vmatprep.subr.bf16.mxu0 0
        %510 = vmatpush1.bf16.msra.mxu0 0
        %511 = vmatprep.subr.bf16.mxu0 0
        %512 = vmatpush1.bf16.msra.mxu0 0
        %513 = vmatprep.subr.bf16.mxu0 0
        %514 = vmatpush1.bf16.msra.mxu0 0
        %515 = vmatprep.subr.bf16.mxu0 0
        %516 = vmatpush1.bf16.msra.mxu0 0
        %517 = vmatprep.subr.bf16.mxu0 0
        %518 = vmatpush1.bf16.msra.mxu0 %v410
        %519 = vmatprep.subr.bf16.mxu0 0
        %520 = vmatpush2.bf16.msra.mxu0 0
        %521 = vmatprep.subr.bf16.mxu0 0
        %522 = vmatpush2.bf16.msra.mxu0 0
        %523 = vmatprep.subr.bf16.mxu0 0
        %524 = vmatpush2.bf16.msra.mxu0 0
        %525 = vmatprep.subr.bf16.mxu0 0
        %526 = vmatpush2.bf16.msra.mxu0 0
        %527 = vmatprep.subr.bf16.mxu0 0
        %528 = vmatpush2.bf16.msra.mxu0 0
        %529 = vmatprep.subr.bf16.mxu0 0
        %530 = vmatpush2.bf16.msra.mxu0 0
        %531 = vmatprep.subr.bf16.mxu0 0
        %532 = vmatpush2.bf16.msra.mxu0 0
        %533 = vmatprep.subr.bf16.mxu0 0
        %534 = vmatpush2.bf16.msra.mxu0 0
        %535 = vmatprep.mubr.bf16.mxu0 0
        %536 = vmatmul.mubr.bf16.gmra.mxu0 %v501
        %v537 = vpop.f32.mrf.mxu0
        %v538 = vadd.f32 0.0, %v537
        %v539 = vpop.f32.mrf.mxu0
        %v540 = vpop.f32.mrf.mxu0
        %v541 = vadd.f32 0.0, %v540
        %v542 = vpop.f32.mrf.mxu0
        %543 = vdwg.mxu0
        %v544 = vadd.f32 %v494, %v538
        %v545 = vadd.f32 %v497, %v541
        %v546 = vadd.f32 %v393, %v544
        %v547 = vadd.f32 %v394, %v545
        %v548 = vpack.c.bf16 %v238, %v237
        %v549 = vunpack.c.l.bf16 %v548
        %v550 = vunpack.c.h.bf16 %v548
        %v551 = vsub.f32 %v237, %v549
        %v552 = vsub.f32 %v238, %v550
        %v553 = vpack.c.bf16 %v552, %v551
        %v554 = vunpack.c.l.bf16 %v553
        %v555 = vunpack.c.h.bf16 %v553
        %v556 = vsub.f32 %v551, %v554
        %v557 = vsub.f32 %v552, %v555
        %v558 = vpack.c.bf16 %v557, %v556
        %v560 = vsel %vm260, %v553, 0
        %562 = vmatprep.subr.bf16.mxu0 0
        %563 = vmatpush1.bf16.msra.mxu0 0
        %564 = vmatprep.subr.bf16.mxu0 0
        %565 = vmatpush1.bf16.msra.mxu0 0
        %566 = vmatprep.subr.bf16.mxu0 0
        %567 = vmatpush1.bf16.msra.mxu0 0
        %568 = vmatprep.subr.bf16.mxu0 0
        %569 = vmatpush1.bf16.msra.mxu0 0
        %570 = vmatprep.subr.bf16.mxu0 0
        %571 = vmatpush1.bf16.msra.mxu0 0
        %572 = vmatprep.subr.bf16.mxu0 0
        %573 = vmatpush1.bf16.msra.mxu0 0
        %574 = vmatprep.subr.bf16.mxu0 0
        %575 = vmatpush1.bf16.msra.mxu0 0
        %576 = vmatprep.subr.bf16.mxu0 0
        %577 = vmatpush1.bf16.msra.mxu0 %v258
        %578 = vmatprep.subr.bf16.mxu0 0
        %579 = vmatpush2.bf16.msra.mxu0 0
        %580 = vmatprep.subr.bf16.mxu0 0
        %581 = vmatpush2.bf16.msra.mxu0 0
        %582 = vmatprep.subr.bf16.mxu0 0
        %583 = vmatpush2.bf16.msra.mxu0 0
        %584 = vmatprep.subr.bf16.mxu0 0
        %585 = vmatpush2.bf16.msra.mxu0 0
        %586 = vmatprep.subr.bf16.mxu0 0
        %587 = vmatpush2.bf16.msra.mxu0 0
        %588 = vmatprep.subr.bf16.mxu0 0
        %589 = vmatpush2.bf16.msra.mxu0 0
        %590 = vmatprep.subr.bf16.mxu0 0
        %591 = vmatpush2.bf16.msra.mxu0 0
        %592 = vmatprep.subr.bf16.mxu0 0
        %593 = vmatpush2.bf16.msra.mxu0 0
        %594 = vmatprep.mubr.bf16.mxu0 0
        %595 = vmatmul.mubr.bf16.gmra.mxu0 %v560
        %v596 = vpop.f32.mrf.mxu0
        %v597 = vadd.f32 0.0, %v596
        %v598 = vpop.f32.mrf.mxu0
        %v599 = vpop.f32.mrf.mxu0
        %v600 = vadd.f32 0.0, %v599
        %v601 = vpop.f32.mrf.mxu0
        %602 = vdwg.mxu0
        %v604 = vsel %vm260, %v548, 0
        %606 = vmatprep.subr.bf16.mxu0 0
        %607 = vmatpush1.bf16.msra.mxu0 0
        %608 = vmatprep.subr.bf16.mxu0 0
        %609 = vmatpush1.bf16.msra.mxu0 0
        %610 = vmatprep.subr.bf16.mxu0 0
        %611 = vmatpush1.bf16.msra.mxu0 0
        %612 = vmatprep.subr.bf16.mxu0 0
        %613 = vmatpush1.bf16.msra.mxu0 0
        %614 = vmatprep.subr.bf16.mxu0 0
        %615 = vmatpush1.bf16.msra.mxu0 0
        %616 = vmatprep.subr.bf16.mxu0 0
        %617 = vmatpush1.bf16.msra.mxu0 0
        %618 = vmatprep.subr.bf16.mxu0 0
        %619 = vmatpush1.bf16.msra.mxu0 0
        %620 = vmatprep.subr.bf16.mxu0 0
        %621 = vmatpush1.bf16.msra.mxu0 %v258
        %622 = vmatprep.subr.bf16.mxu0 0
        %623 = vmatpush2.bf16.msra.mxu0 0
        %624 = vmatprep.subr.bf16.mxu0 0
        %625 = vmatpush2.bf16.msra.mxu0 0
        %626 = vmatprep.subr.bf16.mxu0 0
        %627 = vmatpush2.bf16.msra.mxu0 0
        %628 = vmatprep.subr.bf16.mxu0 0
        %629 = vmatpush2.bf16.msra.mxu0 0
        %630 = vmatprep.subr.bf16.mxu0 0
        %631 = vmatpush2.bf16.msra.mxu0 0
        %632 = vmatprep.subr.bf16.mxu0 0
        %633 = vmatpush2.bf16.msra.mxu0 0
        %634 = vmatprep.subr.bf16.mxu0 0
        %635 = vmatpush2.bf16.msra.mxu0 0
        %636 = vmatprep.subr.bf16.mxu0 0
        %637 = vmatpush2.bf16.msra.mxu0 0
        %638 = vmatprep.mubr.bf16.mxu0 0
        %639 = vmatmul.mubr.bf16.gmra.mxu0 %v604
        %v640 = vpop.f32.mrf.mxu0
        %v641 = vadd.f32 %v597, %v640
        %v642 = vpop.f32.mrf.mxu0
        %v643 = vpop.f32.mrf.mxu0
        %v644 = vadd.f32 %v600, %v643
        %v645 = vpop.f32.mrf.mxu0
        %646 = vdwg.mxu0
        %v648 = vsel %vm260, %v558, 0
        %650 = vmatprep.subr.bf16.mxu0 0
        %651 = vmatpush1.bf16.msra.mxu0 0
        %652 = vmatprep.subr.bf16.mxu0 0
        %653 = vmatpush1.bf16.msra.mxu0 0
        %654 = vmatprep.subr.bf16.mxu0 0
        %655 = vmatpush1.bf16.msra.mxu0 0
        %656 = vmatprep.subr.bf16.mxu0 0
        %657 = vmatpush1.bf16.msra.mxu0 0
        %658 = vmatprep.subr.bf16.mxu0 0
        %659 = vmatpush1.bf16.msra.mxu0 0
        %660 = vmatprep.subr.bf16.mxu0 0
        %661 = vmatpush1.bf16.msra.mxu0 0
        %662 = vmatprep.subr.bf16.mxu0 0
        %663 = vmatpush1.bf16.msra.mxu0 0
        %664 = vmatprep.subr.bf16.mxu0 0
        %665 = vmatpush1.bf16.msra.mxu0 %v258
        %666 = vmatprep.subr.bf16.mxu0 0
        %667 = vmatpush2.bf16.msra.mxu0 0
        %668 = vmatprep.subr.bf16.mxu0 0
        %669 = vmatpush2.bf16.msra.mxu0 0
        %670 = vmatprep.subr.bf16.mxu0 0
        %671 = vmatpush2.bf16.msra.mxu0 0
        %672 = vmatprep.subr.bf16.mxu0 0
        %673 = vmatpush2.bf16.msra.mxu0 0
        %674 = vmatprep.subr.bf16.mxu0 0
        %675 = vmatpush2.bf16.msra.mxu0 0
        %676 = vmatprep.subr.bf16.mxu0 0
        %677 = vmatpush2.bf16.msra.mxu0 0
        %678 = vmatprep.subr.bf16.mxu0 0
        %679 = vmatpush2.bf16.msra.mxu0 0
        %680 = vmatprep.subr.bf16.mxu0 0
        %681 = vmatpush2.bf16.msra.mxu0 0
        %682 = vmatprep.mubr.bf16.mxu0 0
        %683 = vmatmul.mubr.bf16.gmra.mxu0 %v648
        %v684 = vpop.f32.mrf.mxu0
        %v685 = vadd.f32 0.0, %v684
        %v686 = vpop.f32.mrf.mxu0
        %v687 = vpop.f32.mrf.mxu0
        %v688 = vadd.f32 0.0, %v687
        %v689 = vpop.f32.mrf.mxu0
        %690 = vdwg.mxu0
        %v691 = vadd.f32 %v641, %v685
        %v692 = vadd.f32 %v644, %v688
        %v693 = vpack.c.bf16 %v242, %v241
        %v694 = vunpack.c.l.bf16 %v693
        %v695 = vunpack.c.h.bf16 %v693
        %v696 = vsub.f32 %v241, %v694
        %v697 = vsub.f32 %v242, %v695
        %v698 = vpack.c.bf16 %v697, %v696
        %v699 = vunpack.c.l.bf16 %v698
        %v700 = vunpack.c.h.bf16 %v698
        %v701 = vsub.f32 %v696, %v699
        %v702 = vsub.f32 %v697, %v700
        %v703 = vpack.c.bf16 %v702, %v701
        %v705 = vsel %vm260, %v698, 0
        %707 = vmatprep.subr.bf16.mxu0 0
        %708 = vmatpush1.bf16.msra.mxu0 0
        %709 = vmatprep.subr.bf16.mxu0 0
        %710 = vmatpush1.bf16.msra.mxu0 0
        %711 = vmatprep.subr.bf16.mxu0 0
        %712 = vmatpush1.bf16.msra.mxu0 0
        %713 = vmatprep.subr.bf16.mxu0 0
        %714 = vmatpush1.bf16.msra.mxu0 0
        %715 = vmatprep.subr.bf16.mxu0 0
        %716 = vmatpush1.bf16.msra.mxu0 0
        %717 = vmatprep.subr.bf16.mxu0 0
        %718 = vmatpush1.bf16.msra.mxu0 0
        %719 = vmatprep.subr.bf16.mxu0 0
        %720 = vmatpush1.bf16.msra.mxu0 0
        %721 = vmatprep.subr.bf16.mxu0 0
        %722 = vmatpush1.bf16.msra.mxu0 %v410
        %723 = vmatprep.subr.bf16.mxu0 0
        %724 = vmatpush2.bf16.msra.mxu0 0
        %725 = vmatprep.subr.bf16.mxu0 0
        %726 = vmatpush2.bf16.msra.mxu0 0
        %727 = vmatprep.subr.bf16.mxu0 0
        %728 = vmatpush2.bf16.msra.mxu0 0
        %729 = vmatprep.subr.bf16.mxu0 0
        %730 = vmatpush2.bf16.msra.mxu0 0
        %731 = vmatprep.subr.bf16.mxu0 0
        %732 = vmatpush2.bf16.msra.mxu0 0
        %733 = vmatprep.subr.bf16.mxu0 0
        %734 = vmatpush2.bf16.msra.mxu0 0
        %735 = vmatprep.subr.bf16.mxu0 0
        %736 = vmatpush2.bf16.msra.mxu0 0
        %737 = vmatprep.subr.bf16.mxu0 0
        %738 = vmatpush2.bf16.msra.mxu0 0
        %739 = vmatprep.mubr.bf16.mxu0 0
        %740 = vmatmul.mubr.bf16.gmra.mxu0 %v705
        %v741 = vpop.f32.mrf.mxu0
        %v742 = vadd.f32 0.0, %v741
        %v743 = vpop.f32.mrf.mxu0
        %v744 = vpop.f32.mrf.mxu0
        %v745 = vadd.f32 0.0, %v744
        %v746 = vpop.f32.mrf.mxu0
        %747 = vdwg.mxu0
        %v749 = vsel %vm260, %v693, 0
        %751 = vmatprep.subr.bf16.mxu0 0
        %752 = vmatpush1.bf16.msra.mxu0 0
        %753 = vmatprep.subr.bf16.mxu0 0
        %754 = vmatpush1.bf16.msra.mxu0 0
        %755 = vmatprep.subr.bf16.mxu0 0
        %756 = vmatpush1.bf16.msra.mxu0 0
        %757 = vmatprep.subr.bf16.mxu0 0
        %758 = vmatpush1.bf16.msra.mxu0 0
        %759 = vmatprep.subr.bf16.mxu0 0
        %760 = vmatpush1.bf16.msra.mxu0 0
        %761 = vmatprep.subr.bf16.mxu0 0
        %762 = vmatpush1.bf16.msra.mxu0 0
        %763 = vmatprep.subr.bf16.mxu0 0
        %764 = vmatpush1.bf16.msra.mxu0 0
        %765 = vmatprep.subr.bf16.mxu0 0
        %766 = vmatpush1.bf16.msra.mxu0 %v410
        %767 = vmatprep.subr.bf16.mxu0 0
        %768 = vmatpush2.bf16.msra.mxu0 0
        %769 = vmatprep.subr.bf16.mxu0 0
        %770 = vmatpush2.bf16.msra.mxu0 0
        %771 = vmatprep.subr.bf16.mxu0 0
        %772 = vmatpush2.bf16.msra.mxu0 0
        %773 = vmatprep.subr.bf16.mxu0 0
        %774 = vmatpush2.bf16.msra.mxu0 0
        %775 = vmatprep.subr.bf16.mxu0 0
        %776 = vmatpush2.bf16.msra.mxu0 0
        %777 = vmatprep.subr.bf16.mxu0 0
        %778 = vmatpush2.bf16.msra.mxu0 0
        %779 = vmatprep.subr.bf16.mxu0 0
        %780 = vmatpush2.bf16.msra.mxu0 0
        %781 = vmatprep.subr.bf16.mxu0 0
        %782 = vmatpush2.bf16.msra.mxu0 0
        %783 = vmatprep.mubr.bf16.mxu0 0
        %784 = vmatmul.mubr.bf16.gmra.mxu0 %v749
        %v785 = vpop.f32.mrf.mxu0
        %v786 = vadd.f32 %v742, %v785
        %v787 = vpop.f32.mrf.mxu0
        %v788 = vpop.f32.mrf.mxu0
        %v789 = vadd.f32 %v745, %v788
        %v790 = vpop.f32.mrf.mxu0
        %791 = vdwg.mxu0
        %v793 = vsel %vm260, %v703, 0
        %795 = vmatprep.subr.bf16.mxu0 0
        %796 = vmatpush1.bf16.msra.mxu0 0
        %797 = vmatprep.subr.bf16.mxu0 0
        %798 = vmatpush1.bf16.msra.mxu0 0
        %799 = vmatprep.subr.bf16.mxu0 0
        %800 = vmatpush1.bf16.msra.mxu0 0
        %801 = vmatprep.subr.bf16.mxu0 0
        %802 = vmatpush1.bf16.msra.mxu0 0
        %803 = vmatprep.subr.bf16.mxu0 0
        %804 = vmatpush1.bf16.msra.mxu0 0
        %805 = vmatprep.subr.bf16.mxu0 0
        %806 = vmatpush1.bf16.msra.mxu0 0
        %807 = vmatprep.subr.bf16.mxu0 0
        %808 = vmatpush1.bf16.msra.mxu0 0
        %809 = vmatprep.subr.bf16.mxu0 0
        %810 = vmatpush1.bf16.msra.mxu0 %v410
        %811 = vmatprep.subr.bf16.mxu0 0
        %812 = vmatpush2.bf16.msra.mxu0 0
        %813 = vmatprep.subr.bf16.mxu0 0
        %814 = vmatpush2.bf16.msra.mxu0 0
        %815 = vmatprep.subr.bf16.mxu0 0
        %816 = vmatpush2.bf16.msra.mxu0 0
        %817 = vmatprep.subr.bf16.mxu0 0
        %818 = vmatpush2.bf16.msra.mxu0 0
        %819 = vmatprep.subr.bf16.mxu0 0
        %820 = vmatpush2.bf16.msra.mxu0 0
        %821 = vmatprep.subr.bf16.mxu0 0
        %822 = vmatpush2.bf16.msra.mxu0 0
        %823 = vmatprep.subr.bf16.mxu0 0
        %824 = vmatpush2.bf16.msra.mxu0 0
        %825 = vmatprep.subr.bf16.mxu0 0
        %826 = vmatpush2.bf16.msra.mxu0 0
        %827 = vmatprep.mubr.bf16.mxu0 0
        %828 = vmatmul.mubr.bf16.gmra.mxu0 %v793
        %v829 = vpop.f32.mrf.mxu0
        %v830 = vadd.f32 0.0, %v829
        %v831 = vpop.f32.mrf.mxu0
        %v832 = vpop.f32.mrf.mxu0
        %v833 = vadd.f32 0.0, %v832
        %v834 = vpop.f32.mrf.mxu0
        %835 = vdwg.mxu0
        %v836 = vadd.f32 %v786, %v830
        %v837 = vadd.f32 %v789, %v833
        %v838 = vadd.f32 %v691, %v836
        %v839 = vadd.f32 %v692, %v837
        %vm840 = vcmask 261120
        %841 = vst.msk [vmem:[%s217] sm:$0xff] %vm840, %v546
        %842 = vst.msk [vmem:[%s217 + $0x8] sm:$0xff] %vm840, %v547
        %845 = vrot.lane.b32.xlu0 %v838, 32
        %v846 = vpop.permute.xlu0 %845
        %847 = vrot.lane.b32.xlu0 %v839, 32
        %v848 = vpop.permute.xlu0 %847
        %vm851 = vcmask 523520
        %852 = vst.msk [vmem:[%s217] sm:$0xff] %vm851, %v846
        %853 = vst.msk [vmem:[%s217 + $0x8] sm:$0xff] %vm851, %v848
        %s854 = smul.u32 2, %s22
        %p855 = scmp.lt.s32.totalorder %s21, 1
        %s856 = scalar_select %p855, %s21, 1
        %p857 = scmp.lt.s32.totalorder %s854, 1
        %s858 = scalar_select %p857, %s854, 1
        %s859 = smul.addr %s856, 2
        %s860 = sadd.s32 %s858, %s859
        %s861 = smul.addr %s860, 8
        %s862 = scalar_lea.vmem %s3, %s861
        // Predicated region
        $region37: #{_reconstruction_forward_impl.1} parent=31 // pred_check
          %p863 = pneg %p119
        $region38: #{_reconstruction_forward_impl.1} parent=31 // pred_check_branch
          %865 = sbr.rel (%p863) target = $region40
        $region39: #{_reconstruction_forward_impl.1} parent=31 // pred_region
          %s866 = smul.u32 2, %s22
        $region40: #{_reconstruction_forward_impl.1} parent=31 // pred_fallthru
          _
      $region32: #{_reconstruction_forward_impl.1} parent=5 // pred_fallthru
        _
      %p867 = scmp.le.s32.totalorder 2, %s12
      // Predicated region
      $region41: #{_reconstruction_forward_impl.1} parent=5 // pred_check
        %p868 = pneg %p867
      $region42: #{_reconstruction_forward_impl.1} parent=5 // pred_check_branch
        %870 = sbr.rel (%p868) target = $region44
      $region43: #{_reconstruction_forward_impl.1} parent=5 // pred_region
        %s871 = ssub.s32 %s12, 2
        // Predicated region
        $region45: #{_reconstruction_forward_impl.1} parent=43 // pred_check
          %p872 = pneg %p125
        $region46: #{_reconstruction_forward_impl.1} parent=43 // pred_check_branch
          %874 = sbr.rel (%p872) target = $region48
        $region47: #{_reconstruction_forward_impl.1} parent=43 // pred_region
          %s875 = smul.u32 2, %s24
          %p876 = scmp.lt.s32.totalorder %s23, 1
          %s877 = scalar_select %p876, %s23, 1
          %p878 = scmp.lt.s32.totalorder %s875, 1
          %s879 = scalar_select %p878, %s875, 1
          %s880 = smul.addr %s877, 2
          %s881 = sadd.s32 %s879, %s880
          %s882 = smul.addr %s881, 8
          %s883 = scalar_lea.vmem %s3, %s882
        $region48: #{_reconstruction_forward_impl.1} parent=43 // pred_fallthru
          _
      $region44: #{_reconstruction_forward_impl.1} parent=5 // pred_fallthru
        _
    $region6: #{_reconstruction_forward_impl.1} parent=1 // loop_footer
      %s16 = sadd.s32 1, %s12
    $region7: #{_reconstruction_forward_impl.1} parent=1 // loop_footer_branch
      %11 = sbr.rel target = $region3
    $region8: #{_reconstruction_forward_impl.1} parent=1 // loop_exit
      _
    %884 = vsyncpa [#allocation3], 1
    %s885 = scalar_lea.sflag [#allocation3], 1
    %886 = vsyncpa %s885, 1

</llo_original>
